<compile_context>
chip_gen: v7x
topology: tpu7x:2x2x1
jax: 0.10.0
libtpu: 0.0.40
codegen_flags: <defaults>
</compile_context>

<pallas_src>
import functools

import jax
import jax.numpy as jnp
from jax.experimental import pallas as pl
from jax.experimental.pallas import tpu as pltpu


def _gconv_kernel(a_ref, x_ref, w_ref, b_ref, o_ref, *, norm):
    # a_ref: (B, N, N) f32
    # x_ref: (B*N, Cin) f32          (batch folded into rows)
    # w_ref: (Cin, 2*Cout) f32       (wa | wu concatenated along out dim)
    # b_ref: (1, 2*Cout) f32         (ba | bu)
    # o_ref: (B*N, Cout)
    B, N, _ = a_ref.shape
    Cout = o_ref.shape[-1]

    # Fused linear + bias + ReLU for both branches in one MXU pass.
    h = jnp.dot(x_ref[...], w_ref[...], preferred_element_type=jnp.float32)
    h = jnp.maximum(h + b_ref[...], 0.0)          # (B*N, 2*Cout) = relu(ax)|relu(ux)
    ax = h[:, :Cout]                              # relu(a_fc(x)), batch-folded
    ux = h[:, Cout:]                              # relu(u_fc(x)), batch-folded

    # Per-batch bmm; B is tiny and static, so a Python loop is fully unrolled.
    for b in range(B):
        a = a_ref[b]                              # (N, N)
        ax_b = ax[b * N:(b + 1) * N, :]           # (N, Cout)

        if norm:
            # F.normalize(A, p=1, dim=-2): divide each column j of A by its
            # L1 norm l1[j].  Fold that into the bmm by scaling row j of ax
            # by 1/l1[j] instead of touching the (N, N) matrix A.
            col_l1 = jnp.sum(jnp.abs(a), axis=0, keepdims=True)       # (1, N)
            inv = pl.reciprocal(jnp.maximum(col_l1, 1e-12), approx=False)
            ax_b = ax_b * inv.T                   # (N, Cout) * (N, 1)

        o_ref[pl.ds(b * N, N), :] = (
            jnp.dot(a, ax_b, preferred_element_type=jnp.float32)
            + ux[b * N:(b + 1) * N, :]
        ).astype(o_ref.dtype)


def gconv(A, x, wa, ba, wu, bu, *, norm=True):
    """A: (B,N,N), x: (B,N,Cin), wa/wu: (Cin,Cout), ba/bu: (Cout,)."""
    B, N, _ = A.shape
    Cin = x.shape[-1]
    Cout = wa.shape[-1]

    # Fuse the two linear layers wrapper-side.
    w_fused = jnp.concatenate([wa, wu], axis=1)                 # (Cin, 2*Cout)
    b_fused = jnp.concatenate([ba, bu], axis=0).reshape(1, 2 * Cout)
    x_flat = x.reshape(B * N, Cin)                              # fold batch into rows

    flops = B * (2 * N * Cin * (2 * Cout)) + B * (2 * N * N * Cout)
    bytes_accessed = 4 * (
        B * N * N + B * N * Cin + Cin * 2 * Cout + 2 * Cout + B * N * Cout
    )

    out_flat = pl.pallas_call(
        functools.partial(_gconv_kernel, norm=norm),
        out_shape=jax.ShapeDtypeStruct((B * N, Cout), x.dtype),
        grid_spec=pltpu.PrefetchScalarGridSpec(
            num_scalar_prefetch=0,
            grid=(1,),
            in_specs=[
                pl.BlockSpec((B, N, N), lambda i: (0, 0, 0)),         # A (all batches)
                pl.BlockSpec((B * N, Cin), lambda i: (0, 0)),         # x (batch-folded)
                pl.BlockSpec((Cin, 2 * Cout), lambda i: (0, 0)),      # fused weight
                pl.BlockSpec((1, 2 * Cout), lambda i: (0, 0)),        # fused bias
            ],
            out_specs=pl.BlockSpec((B * N, Cout), lambda i: (0, 0)),
        ),
        compiler_params=pltpu.CompilerParams(
            dimension_semantics=("arbitrary",),
        ),
        cost_estimate=pl.CostEstimate(
            flops=flops, transcendentals=0, bytes_accessed=bytes_accessed
        ),
    )(A, x_flat, w_fused, b_fused)

    return out_flat.reshape(B, N, Cout)


def gconv_ref(A, x, wa, ba, wu, bu, *, norm=True):
    """Pure-JAX reference matching the PyTorch forward."""
    if norm:
        col_l1 = jnp.sum(jnp.abs(A), axis=-2, keepdims=True)
        A = A / jnp.maximum(col_l1, 1e-12)
    ax = jnp.maximum(x @ wa + ba, 0.0)
    ux = jnp.maximum(x @ wu + bu, 0.0)
    return jnp.einsum("bij,bjk->bik", A, ax) + ux


if __name__ == "__main__":
    # Small shapes consistent with the module: batch=2, N(nodes)=16,
    # in_features=32, out_features=32.
    B, N, Cin, Cout = 2, 16, 32, 32

    key = jax.random.PRNGKey(0)
    k_a, k_x, k_wa, k_ba, k_wu, k_bu = jax.random.split(key, 6)

    A = jax.random.uniform(k_a, (B, N, N), dtype=jnp.float32)
    x = jax.random.normal(k_x, (B, N, Cin), dtype=jnp.float32)

    # nn.Linear has weight (out,in), bias (out,); store weight pre-transposed
    # as (in, out) so the kernel does a plain row-major matmul.
    bound = 1.0 / (Cin ** 0.5)
    wa = jax.random.uniform(k_wa, (Cin, Cout), jnp.float32, -bound, bound)
    ba = jax.random.uniform(k_ba, (Cout,), jnp.float32, -bound, bound)
    wu = jax.random.uniform(k_wu, (Cin, Cout), jnp.float32, -bound, bound)
    bu = jax.random.uniform(k_bu, (Cout,), jnp.float32, -bound, bound)

    out = gconv(A, x, wa, ba, wu, bu, norm=True)
    out = jax.block_until_ready(out)

    ref = gconv_ref(A, x, wa, ba, wu, bu, norm=True)
    assert out.shape == (B, N, Cout)
    assert jnp.allclose(out, ref, atol=1e-5, rtol=1e-5), "mismatch vs reference"

    # Also exercise the norm=False path of the module.
    out_nn = jax.block_until_ready(gconv(A, x, wa, ba, wu, bu, norm=False))
    ref_nn = gconv_ref(A, x, wa, ba, wu, bu, norm=False)
    assert jnp.allclose(out_nn, ref_nn, atol=1e-5, rtol=1e-5), "mismatch (norm=False)"

    print("KERNEL_OK")
</pallas_src>

<mosaic_0001>
module attributes {stable_mosaic.version = 11 : i64} {
  func.func @_gconv_kernel(%arg0: i32, %arg1: memref<2x16x16xf32, #tpu.memory_space<vmem>>, %arg2: memref<32x32xf32, #tpu.memory_space<vmem>>, %arg3: memref<32x64xf32, #tpu.memory_space<vmem>>, %arg4: memref<1x64xf32, #tpu.memory_space<vmem>>, %arg5: memref<32x32xf32, #tpu.memory_space<vmem>>) attributes {dimension_semantics = [#tpu.dimension_semantics<arbitrary>], iteration_bounds = array<i64: 1>, scalar_prefetch = 0 : i64, scratch_operands = 0 : i64, tpu.core_type = #tpu.core_type<tc>, window_params = [{pipeline_mode = #tpu.pipeline_mode<synchronous>, transform_indices = @transform_0, window_bounds = array<i64: 2, 16, 16>}, {pipeline_mode = #tpu.pipeline_mode<synchronous>, transform_indices = @transform_1, window_bounds = array<i64: 32, 32>}, {pipeline_mode = #tpu.pipeline_mode<synchronous>, transform_indices = @transform_2, window_bounds = array<i64: 32, 64>}, {pipeline_mode = #tpu.pipeline_mode<synchronous>, transform_indices = @transform_3, window_bounds = array<i64: 1, 64>}, {pipeline_mode = #tpu.pipeline_mode<synchronous>, transform_indices = @transform_4, window_bounds = array<i64: 32, 32>}]} {
    %c0 = arith.constant 0 : index
    %c0_0 = arith.constant 0 : index
    %0 = vector.load %arg2[%c0, %c0_0] : memref<32x32xf32, #tpu.memory_space<vmem>>, vector<32x32xf32>
    %c0_1 = arith.constant 0 : index
    %c0_2 = arith.constant 0 : index
    %1 = vector.load %arg3[%c0_1, %c0_2] : memref<32x64xf32, #tpu.memory_space<vmem>>, vector<32x64xf32>
    %cst = arith.constant dense<0.000000e+00> : vector<32x64xf32>
    %2 = tpu.matmul %0, %1, %cst {dimension_numbers = #tpu.dot_dimension_numbers<[1], [0], [0], [1], [0, 0, 1, 1], [], []>} : vector<32x32xf32>, vector<32x64xf32>, vector<32x64xf32> -> vector<32x64xf32>
    %c0_3 = arith.constant 0 : index
    %c0_4 = arith.constant 0 : index
    %3 = vector.load %arg4[%c0_3, %c0_4] : memref<1x64xf32, #tpu.memory_space<vmem>>, vector<1x64xf32>
    %4 = vector.broadcast %3 : vector<1x64xf32> to vector<32x64xf32>
    %5 = arith.addf %2, %4 : vector<32x64xf32>
    %cst_5 = arith.constant 0.000000e+00 : f32
    %6 = vector.broadcast %cst_5 : f32 to vector<32x64xf32>
    %7 = arith.maximumf %5, %6 : vector<32x64xf32>
    %8 = vector.extract_strided_slice %7 {offsets = [0, 0], sizes = [32, 32], strides = [1, 1]} : vector<32x64xf32> to vector<32x32xf32>
    %9 = vector.extract_strided_slice %7 {offsets = [0, 32], sizes = [32, 32], strides = [1, 1]} : vector<32x64xf32> to vector<32x32xf32>
    %c0_6 = arith.constant 0 : index
    %c0_7 = arith.constant 0 : index
    %c0_8 = arith.constant 0 : index
    %10 = vector.load %arg1[%c0_6, %c0_7, %c0_8] : memref<2x16x16xf32, #tpu.memory_space<vmem>>, vector<1x16x16xf32>
    %11 = vector.shape_cast %10 : vector<1x16x16xf32> to vector<16x16xf32>
    %12 = vector.extract_strided_slice %8 {offsets = [0, 0], sizes = [16, 32], strides = [1, 1]} : vector<32x32xf32> to vector<16x32xf32>
    %13 = math.absf %11 : vector<16x16xf32>
    %cst_9 = arith.constant dense<0.000000e+00> : vector<16xf32>
    %14 = vector.multi_reduction <add>, %13, %cst_9 [0] : vector<16x16xf32> to vector<16xf32>
    %15 = vector.shape_cast %14 : vector<16xf32> to vector<1x16xf32>
    %cst_10 = arith.constant 9.99999996E-13 : f32
    %16 = vector.broadcast %cst_10 : f32 to vector<1x16xf32>
    %17 = arith.maximumf %15, %16 : vector<1x16xf32>
    %18 = tpu.reciprocal %17 : vector<1x16xf32> -> vector<1x16xf32>
    %19 = tpu.transpose %18, [1, 0] : vector<1x16xf32> -> vector<16x1xf32>
    %20 = vector.broadcast %19 : vector<16x1xf32> to vector<16x32xf32>
    %21 = arith.mulf %12, %20 : vector<16x32xf32>
    %cst_11 = arith.constant dense<0.000000e+00> : vector<16x32xf32>
    %22 = tpu.matmul %11, %21, %cst_11 {dimension_numbers = #tpu.dot_dimension_numbers<[1], [0], [0], [1], [0, 0, 1, 1], [], []>} : vector<16x16xf32>, vector<16x32xf32>, vector<16x32xf32> -> vector<16x32xf32>
    %23 = vector.extract_strided_slice %9 {offsets = [0, 0], sizes = [16, 32], strides = [1, 1]} : vector<32x32xf32> to vector<16x32xf32>
    %24 = arith.addf %22, %23 : vector<16x32xf32>
    %c0_12 = arith.constant 0 : index
    %c0_13 = arith.constant 0 : index
    %25 = vector.load %arg5[%c0_12, %c0_13] : memref<32x32xf32, #tpu.memory_space<vmem>>, vector<16x32xf32>
    tpu.vector_store %arg5[%c0_12, %c0_13], %24 {strides = array<i32>} : memref<32x32xf32, #tpu.memory_space<vmem>>, vector<16x32xf32>,
    %c1 = arith.constant 1 : index
    %c0_14 = arith.constant 0 : index
    %c0_15 = arith.constant 0 : index
    %26 = vector.load %arg1[%c1, %c0_14, %c0_15] : memref<2x16x16xf32, #tpu.memory_space<vmem>>, vector<1x16x16xf32>
    %27 = vector.shape_cast %26 : vector<1x16x16xf32> to vector<16x16xf32>
    %28 = vector.extract_strided_slice %8 {offsets = [16, 0], sizes = [16, 32], strides = [1, 1]} : vector<32x32xf32> to vector<16x32xf32>
    %29 = math.absf %27 : vector<16x16xf32>
    %cst_16 = arith.constant dense<0.000000e+00> : vector<16xf32>
    %30 = vector.multi_reduction <add>, %29, %cst_16 [0] : vector<16x16xf32> to vector<16xf32>
    %31 = vector.shape_cast %30 : vector<16xf32> to vector<1x16xf32>
    %cst_17 = arith.constant 9.99999996E-13 : f32
    %32 = vector.broadcast %cst_17 : f32 to vector<1x16xf32>
    %33 = arith.maximumf %31, %32 : vector<1x16xf32>
    %34 = tpu.reciprocal %33 : vector<1x16xf32> -> vector<1x16xf32>
    %35 = tpu.transpose %34, [1, 0] : vector<1x16xf32> -> vector<16x1xf32>
    %36 = vector.broadcast %35 : vector<16x1xf32> to vector<16x32xf32>
    %37 = arith.mulf %28, %36 : vector<16x32xf32>
    %cst_18 = arith.constant dense<0.000000e+00> : vector<16x32xf32>
    %38 = tpu.matmul %27, %37, %cst_18 {dimension_numbers = #tpu.dot_dimension_numbers<[1], [0], [0], [1], [0, 0, 1, 1], [], []>} : vector<16x16xf32>, vector<16x32xf32>, vector<16x32xf32> -> vector<16x32xf32>
    %39 = vector.extract_strided_slice %9 {offsets = [16, 0], sizes = [16, 32], strides = [1, 1]} : vector<32x32xf32> to vector<16x32xf32>
    %40 = arith.addf %38, %39 : vector<16x32xf32>
    %c16 = arith.constant 16 : index
    %c0_19 = arith.constant 0 : index
    %41 = vector.load %arg5[%c16, %c0_19] : memref<32x32xf32, #tpu.memory_space<vmem>>, vector<16x32xf32>
    tpu.vector_store %arg5[%c16, %c0_19], %40 {strides = array<i32>} : memref<32x32xf32, #tpu.memory_space<vmem>>, vector<16x32xf32>,
    return
  }
  func.func @transform_0(%arg0: i32) -> (i32, i32, i32) {
    %c0_i32 = arith.constant 0 : i32
    %c0_i32_0 = arith.constant 0 : i32
    %c0_i32_1 = arith.constant 0 : i32
    %c0_i32_2 = arith.constant 0 : i32
    return %c0_i32, %c0_i32_0, %c0_i32_1 : i32, i32, i32
  }
  func.func @transform_1(%arg0: i32) -> (i32, i32) {
    %c0_i32 = arith.constant 0 : i32
    %c0_i32_0 = arith.constant 0 : i32
    %c0_i32_1 = arith.constant 0 : i32
    return %c0_i32, %c0_i32_0 : i32, i32
  }
  func.func @transform_2(%arg0: i32) -> (i32, i32) {
    %c0_i32 = arith.constant 0 : i32
    %c0_i32_0 = arith.constant 0 : i32
    %c0_i32_1 = arith.constant 0 : i32
    return %c0_i32, %c0_i32_0 : i32, i32
  }
  func.func @transform_3(%arg0: i32) -> (i32, i32) {
    %c0_i32 = arith.constant 0 : i32
    %c0_i32_0 = arith.constant 0 : i32
    %c0_i32_1 = arith.constant 0 : i32
    return %c0_i32, %c0_i32_0 : i32, i32
  }
  func.func @transform_4(%arg0: i32) -> (i32, i32) {
    %c0_i32 = arith.constant 0 : i32
    %c0_i32_0 = arith.constant 0 : i32
    %c0_i32_1 = arith.constant 0 : i32
    return %c0_i32, %c0_i32_0 : i32, i32
  }
}

</mosaic_0001>

<llo_original>
// kernel: tpu_custom_call.1
$region0: #{tpu_custom_call.1}
  #allocation0 [shape = 'u32[]', space=smem, size = 0x4, offset = 0x4, fixed_abs, tag = 'smem constant byte address 0x4 - core index']
  #allocation1 [shape = 'u32[144,128]{1,0:T(1,128)}', space=vmem, size = 0x12000, scoped, tag = 'internal scratch']
  %s0 = inlined_call_operand.hbm [shape: f32[2,16,16], index: 0, kind: input, shape index: {}]
  %s1 = inlined_call_operand.hbm [shape: f32[32,32], index: 1, kind: input, shape index: {}]
  %s2 = inlined_call_operand.hbm [shape: f32[32,64], index: 2, kind: input, shape index: {}]
  %s3 = inlined_call_operand.vmem [shape: f32[1,64], index: 3, kind: input, shape index: {}]
  %s4 = inlined_call_operand.hbm [shape: f32[32,32], index: 4, kind: output, shape index: {}]
  %s5 = sld [smem:[#allocation0]]
  $region38: #{tpu_custom_call.1} parent=0
    _
  %s7 = ssub.s32 1, %s5
  %s8 = scalar_select 0, %s7, %s5
  $region1: #{tpu_custom_call.1} parent=0
    #allocation2 [shape = 'u8[16384]{0}', space=vmem, size = 0x4000, scoped, tag = 'input window, operand 0, single buffered']
    #allocation3 [shape = 's32[1]{0}', space=sflag, size = 0x4, scoped, tag = 'scoped memory for tpu_custom_call.1']
    #allocation4 [shape = 's32[1]{0}', space=sflag, size = 0x4, scoped, tag = 'scoped memory for tpu_custom_call.1']
    #allocation5 [shape = 'u8[16384]{0}', space=vmem, size = 0x4000, scoped, tag = 'input window, operand 1, single buffered']
    #allocation6 [shape = 's32[1]{0}', space=sflag, size = 0x4, scoped, tag = 'scoped memory for tpu_custom_call.1']
    #allocation7 [shape = 'u8[16384]{0}', space=vmem, size = 0x4000, scoped, tag = 'input window, operand 2, single buffered']
    #allocation8 [shape = 'u8[16384]{0}', space=vmem, size = 0x4000, scoped, tag = 'output window, operand 0, single buffered']
    %9 = vsyncpa [#allocation3], 0
    %10 = vsyncpa [#allocation6], 0
    %11 = vsyncpa [#allocation4], 0
    // Predicated region
    $region2: #{tpu_custom_call.1} parent=1 // pred_check
      _
    $region3: #{tpu_custom_call.1} parent=1 // pred_check_branch
      %13 = sbr.rel (0) target = $region5
    $region4: #{tpu_custom_call.1} parent=1 // pred_region
      %s15 = ssub.s32 512, 512
      %16 = vsyncadd [#allocation3], %s15
      %s17 = sshll.u32 [#allocation2], 4
      %s18 = int_to_ptr.vmem [resolvable:$true] %s17
      %23 = dma.hbm_to_vmem [thread:$0]  %s0, 512, %s18, [#allocation3], 128, 128, 8
    $region5: #{tpu_custom_call.1} parent=1 // pred_fallthru
      _
    // Predicated region
    $region6: #{tpu_custom_call.1} parent=1 // pred_check
      _
    $region7: #{tpu_custom_call.1} parent=1 // pred_check_branch
      %25 = sbr.rel (0) target = $region9
    $region8: #{tpu_custom_call.1} parent=1 // pred_region
      %s27 = ssub.s32 512, 512
      %28 = vsyncadd [#allocation6], %s27
      %s29 = sshll.u32 [#allocation5], 4
      %s30 = int_to_ptr.vmem [resolvable:$true] %s29
      %35 = dma.hbm_to_vmem [thread:$0]  %s1, 512, %s30, [#allocation6], 128, 128, 8
    $region9: #{tpu_custom_call.1} parent=1 // pred_fallthru
      _
    // Predicated region
    $region10: #{tpu_custom_call.1} parent=1 // pred_check
      _
    $region11: #{tpu_custom_call.1} parent=1 // pred_check_branch
      %37 = sbr.rel (0) target = $region13
    $region12: #{tpu_custom_call.1} parent=1 // pred_region
      %s39 = ssub.s32 512, 512
      %40 = vsyncadd [#allocation6], %s39
      %s41 = sshll.u32 [#allocation7], 4
      %s42 = int_to_ptr.vmem [resolvable:$true] %s41
      %47 = dma.hbm_to_vmem [thread:$0]  %s2, 512, %s42, [#allocation6], 128, 128, 8
    $region13: #{tpu_custom_call.1} parent=1 // pred_fallthru
      _
    // Predicated region
    $region14: #{tpu_custom_call.1} parent=1 // pred_check
      _
    $region15: #{tpu_custom_call.1} parent=1 // pred_check_branch
      %49 = sbr.rel (0) target = $region17
    $region16: #{tpu_custom_call.1} parent=1 // pred_region
      _
    $region17: #{tpu_custom_call.1} parent=1 // pred_fallthru
      _
    // Predicated region
    $region18: #{tpu_custom_call.1} parent=1 // pred_check
      _
    $region19: #{tpu_custom_call.1} parent=1 // pred_check_branch
      %51 = sbr.rel (0) target = $region21
    $region20: #{tpu_custom_call.1} parent=1 // pred_region
      %52 = dma.done [#allocation3], 512
    $region21: #{tpu_custom_call.1} parent=1 // pred_fallthru
      _
    // Predicated region
    $region22: #{tpu_custom_call.1} parent=1 // pred_check
      _
    $region23: #{tpu_custom_call.1} parent=1 // pred_check_branch
      %54 = sbr.rel (0) target = $region25
    $region24: #{tpu_custom_call.1} parent=1 // pred_region
      %55 = dma.done [#allocation6], 512
    $region25: #{tpu_custom_call.1} parent=1 // pred_fallthru
      _
    // Predicated region
    $region26: #{tpu_custom_call.1} parent=1 // pred_check
      _
    $region27: #{tpu_custom_call.1} parent=1 // pred_check_branch
      %57 = sbr.rel (0) target = $region29
    $region28: #{tpu_custom_call.1} parent=1 // pred_region
      %58 = dma.done [#allocation6], 512
    $region29: #{tpu_custom_call.1} parent=1 // pred_fallthru
      _
    %v59 = vld [vmem:[#allocation5] sm:$0xff]
    %v60 = vld [vmem:[#allocation5 + $0x8] sm:$0xff]
    %v61 = vld [vmem:[#allocation5 + $0x10] sm:$0xff]
    %v62 = vld [vmem:[#allocation5 + $0x18] sm:$0xff]
    %v63 = vld [vmem:[#allocation7] sm:$0xff]
    %v64 = vld [vmem:[#allocation7 + $0x8] sm:$0xff]
    %v65 = vld [vmem:[#allocation7 + $0x10] sm:$0xff]
    %v66 = vld [vmem:[#allocation7 + $0x18] sm:$0xff]
    %v67 = vld [vmem:[%s3] sm:$0x1]
    %v69 = vlaneseq
    %v70 = vshrl.u32 %v69, 7
    %v71 = vsub.s32 0, %v70
    %v72 = vrot.slane %v67, %v71
    %vm74 = vcmask 261120
    %v76 = vsel %vm74, %v59, 0
    %v79 = vsel %vm74, %v60, 0
    %v82 = vsel %vm74, %v61, 0
    %v85 = vsel %vm74, %v62, 0
    %87 = vmatprep.subr.mxu0 0.0
    %88 = vmatpush1.msra.mxu0 %v63
    %89 = vmatprep.subr.mxu0 0.0
    %90 = vmatpush1.msra.mxu0 %v64
    %91 = vmatprep.subr.mxu0 0.0
    %92 = vmatpush1.msra.mxu0 %v65
    %93 = vmatprep.subr.mxu0 0.0
    %94 = vmatpush1.msra.mxu0 %v66
    %95 = vmatprep.subr.mxu0 0.0
    %96 = vmatpush1.msra.mxu0 0.0
    %97 = vmatprep.subr.mxu0 0.0
    %98 = vmatpush1.msra.mxu0 0.0
    %99 = vmatprep.subr.mxu0 0.0
    %100 = vmatpush1.msra.mxu0 0.0
    %101 = vmatprep.subr.mxu0 0.0
    %102 = vmatpush1.msra.mxu0 0.0
    %103 = vmatprep.subr.mxu0 0.0
    %104 = vmatpush1.msra.mxu0 0.0
    %105 = vmatprep.subr.mxu0 0.0
    %106 = vmatpush1.msra.mxu0 0.0
    %107 = vmatprep.subr.mxu0 0.0
    %108 = vmatpush1.msra.mxu0 0.0
    %109 = vmatprep.subr.mxu0 0.0
    %110 = vmatpush1.msra.mxu0 0.0
    %111 = vmatprep.subr.mxu0 0.0
    %112 = vmatpush1.msra.mxu0 0.0
    %113 = vmatprep.subr.mxu0 0.0
    %114 = vmatpush1.msra.mxu0 0.0
    %115 = vmatprep.subr.mxu0 0.0
    %116 = vmatpush1.msra.mxu0 0.0
    %117 = vmatprep.subr.mxu0 0.0
    %118 = vmatpush1.msra.mxu0 0.0
    %119 = vmatprep.subr.mxu0 0.0
    %120 = vmatpush1.msra.mxu0 0.0
    %121 = vmatprep.subr.mxu0 0.0
    %122 = vmatpush1.msra.mxu0 0.0
    %123 = vmatprep.subr.mxu0 0.0
    %124 = vmatpush1.msra.mxu0 0.0
    %125 = vmatprep.subr.mxu0 0.0
    %126 = vmatpush1.msra.mxu0 0.0
    %127 = vmatprep.subr.mxu0 0.0
    %128 = vmatpush1.msra.mxu0 0.0
    %129 = vmatprep.subr.mxu0 0.0
    %130 = vmatpush1.msra.mxu0 0.0
    %131 = vmatprep.subr.mxu0 0.0
    %132 = vmatpush1.msra.mxu0 0.0
    %133 = vmatprep.subr.mxu0 0.0
    %134 = vmatpush1.msra.mxu0 0.0
    %135 = vmatprep.subr.mxu0 0.0
    %136 = vmatpush1.msra.mxu0 0.0
    %137 = vmatprep.subr.mxu0 0.0
    %138 = vmatpush1.msra.mxu0 0.0
    %139 = vmatprep.subr.mxu0 0.0
    %140 = vmatpush1.msra.mxu0 0.0
    %141 = vmatprep.subr.mxu0 0.0
    %142 = vmatpush1.msra.mxu0 0.0
    %143 = vmatprep.subr.mxu0 0.0
    %144 = vmatpush1.msra.mxu0 0.0
    %145 = vmatprep.subr.mxu0 0.0
    %146 = vmatpush1.msra.mxu0 0.0
    %147 = vmatprep.subr.mxu0 0.0
    %148 = vmatpush1.msra.mxu0 0.0
    %149 = vmatprep.subr.mxu0 0.0
    %150 = vmatpush1.msra.mxu0 0.0
    %151 = vmatprep.mubr.f32.mxu0 0.0
    %152 = vmatmul.mubr.f32.gmra.mrb[0].mxu0 %v76
    %v153 = vpop.f32.mrb[0].mxu0
    %v154 = vadd.f32 %v72, %v153
    %v155 = vpop.f32.mrb[0].mxu0
    %156 = vmatprep.mubr.f32.mxu0 0.0
    %157 = vmatmul.mubr.f32.gmra.mrb[0].mxu0 %v79
    %v158 = vpop.f32.mrb[0].mxu0
    %v159 = vadd.f32 %v72, %v158
    %v160 = vpop.f32.mrb[0].mxu0
    %161 = vmatprep.mubr.f32.mxu0 0.0
    %162 = vmatmul.mubr.f32.gmra.mrb[0].mxu0 %v82
    %v163 = vpop.f32.mrb[0].mxu0
    %v164 = vadd.f32 %v72, %v163
    %v165 = vpop.f32.mrb[0].mxu0
    %166 = vmatprep.mubr.f32.mxu0 0.0
    %167 = vmatmul.mubr.f32.gmra.mrb[0].mxu0 %v85
    %v168 = vpop.f32.mrb[0].mxu0
    %v169 = vadd.f32 %v72, %v168
    %v170 = vpop.f32.mrb[0].mxu0
    %171 = vdwg.mxu0
    %v172 = vmax.f32 %v154, 0.0
    %v173 = vmax.f32 %v159, 0.0
    %v174 = vmax.f32 %v164, 0.0
    %v175 = vmax.f32 %v169, 0.0
    %v176 = vld [vmem:[#allocation2] sm:$0xff]
    %v177 = vld [vmem:[#allocation2 + $0x8] sm:$0xff]
    %v178 = vand.u32 2147483647, %v176
    %v179 = vand.u32 2147483647, %v177
    %vm180 = vcmask 130048
    %v181 = vsel %vm180, %v178, 0.0
    %v182 = vsel %vm180, %v179, 0.0
    %v183 = vadd.f32 %v181, %v182
    %v184 = vrot.slane %v183, 4
    %v185 = vadd.f32 %v183, %v184
    %v186 = vrot.slane %v185, 2
    %v187 = vadd.f32 %v185, %v186
    %v188 = vrot.slane %v187, 1
    %v189 = vadd.f32 %v187, %v188
    %v190 = vmax.f32 %v189, 1e-12
    %v191 = vrcp.pop %v190
    %192 = vxpose.xlu0.b32.start [1/16] %v191, 128
    %193 = vxpose.xlu0.b32.cont [2/16] 0.0, 128
    %194 = vxpose.xlu0.b32.cont [3/16] 0.0, 128
    %195 = vxpose.xlu0.b32.cont [4/16] 0.0, 128
    %196 = vxpose.xlu0.b32.cont [5/16] 0.0, 128
    %197 = vxpose.xlu0.b32.cont [6/16] 0.0, 128
    %198 = vxpose.xlu0.b32.cont [7/16] 0.0, 128
    %199 = vxpose.xlu0.b32.cont [8/16] 0.0, 128
    %200 = vxpose.xlu0.b32.cont [9/16] 0.0, 128
    %201 = vxpose.xlu0.b32.cont [10/16] 0.0, 128
    %202 = vxpose.xlu0.b32.cont [11/16] 0.0, 128
    %203 = vxpose.xlu0.b32.cont [12/16] 0.0, 128
    %204 = vxpose.xlu0.b32.cont [13/16] 0.0, 128
    %205 = vxpose.xlu0.b32.cont [14/16] 0.0, 128
    %206 = vxpose.xlu0.b32.cont [15/16] 0.0, 128
    %207 = vxpose.xlu0.b32.end [16/16] 0.0, 128
    %v208 = vpop.trf.xlu0
    %v209 = vpop.trf.xlu0
    %v210 = vpop.trf.xlu0
    %v211 = vpop.trf.xlu0
    %v212 = vpop.trf.xlu0
    %v213 = vpop.trf.xlu0
    %v214 = vpop.trf.xlu0
    %v215 = vpop.trf.xlu0
    %v216 = vpop.trf.xlu0
    %v217 = vpop.trf.xlu0
    %v218 = vpop.trf.xlu0
    %v219 = vpop.trf.xlu0
    %v220 = vpop.trf.xlu0
    %v221 = vpop.trf.xlu0
    %v222 = vpop.trf.xlu0
    %v223 = vpop.trf.xlu0
    %225 = vset.pattern.permute.xlu0 0
    %226 = vperm.xlu0 %225, %v208
    %v227 = vpop.permute.xlu0 %226
    %230 = vset.pattern.permute.xlu0 0
    %231 = vperm.xlu0 %230, %v209
    %v232 = vpop.permute.xlu0 %231
    %v234 = vmul.f32 %v172, %v227
    %v235 = vmul.f32 %v173, %v232
    %238 = vrot.lane.b32.xlu0 %v172, 96
    %v239 = vpop.permute.xlu0 %238
    %240 = vrot.lane.b32.xlu0 %v173, 96
    %v241 = vpop.permute.xlu0 %240
    %v245 = vsel %vm180, %v176, 0
    %v248 = vsel %vm180, %v177, 0
    %250 = vmatprep.subr.mxu0 0.0
    %251 = vmatpush1.msra.mxu0 %v234
    %252 = vmatprep.subr.mxu0 0.0
    %253 = vmatpush1.msra.mxu0 %v235
    %254 = vmatprep.subr.mxu0 0.0
    %255 = vmatpush1.msra.mxu0 0.0
    %256 = vmatprep.subr.mxu0 0.0
    %257 = vmatpush1.msra.mxu0 0.0
    %258 = vmatprep.subr.mxu0 0.0
    %259 = vmatpush1.msra.mxu0 0.0
    %260 = vmatprep.subr.mxu0 0.0
    %261 = vmatpush1.msra.mxu0 0.0
    %262 = vmatprep.subr.mxu0 0.0
    %263 = vmatpush1.msra.mxu0 0.0
    %264 = vmatprep.subr.mxu0 0.0
    %265 = vmatpush1.msra.mxu0 0.0
    %266 = vmatprep.subr.mxu0 0.0
    %267 = vmatpush1.msra.mxu0 0.0
    %268 = vmatprep.subr.mxu0 0.0
    %269 = vmatpush1.msra.mxu0 0.0
    %270 = vmatprep.subr.mxu0 0.0
    %271 = vmatpush1.msra.mxu0 0.0
    %272 = vmatprep.subr.mxu0 0.0
    %273 = vmatpush1.msra.mxu0 0.0
    %274 = vmatprep.subr.mxu0 0.0
    %275 = vmatpush1.msra.mxu0 0.0
    %276 = vmatprep.subr.mxu0 0.0
    %277 = vmatpush1.msra.mxu0 0.0
    %278 = vmatprep.subr.mxu0 0.0
    %279 = vmatpush1.msra.mxu0 0.0
    %280 = vmatprep.subr.mxu0 0.0
    %281 = vmatpush1.msra.mxu0 0.0
    %282 = vmatprep.subr.mxu0 0.0
    %283 = vmatpush1.msra.mxu0 0.0
    %284 = vmatprep.subr.mxu0 0.0
    %285 = vmatpush1.msra.mxu0 0.0
    %286 = vmatprep.subr.mxu0 0.0
    %287 = vmatpush1.msra.mxu0 0.0
    %288 = vmatprep.subr.mxu0 0.0
    %289 = vmatpush1.msra.mxu0 0.0
    %290 = vmatprep.subr.mxu0 0.0
    %291 = vmatpush1.msra.mxu0 0.0
    %292 = vmatprep.subr.mxu0 0.0
    %293 = vmatpush1.msra.mxu0 0.0
    %294 = vmatprep.subr.mxu0 0.0
    %295 = vmatpush1.msra.mxu0 0.0
    %296 = vmatprep.subr.mxu0 0.0
    %297 = vmatpush1.msra.mxu0 0.0
    %298 = vmatprep.subr.mxu0 0.0
    %299 = vmatpush1.msra.mxu0 0.0
    %300 = vmatprep.subr.mxu0 0.0
    %301 = vmatpush1.msra.mxu0 0.0
    %302 = vmatprep.subr.mxu0 0.0
    %303 = vmatpush1.msra.mxu0 0.0
    %304 = vmatprep.subr.mxu0 0.0
    %305 = vmatpush1.msra.mxu0 0.0
    %306 = vmatprep.subr.mxu0 0.0
    %307 = vmatpush1.msra.mxu0 0.0
    %308 = vmatprep.subr.mxu0 0.0
    %309 = vmatpush1.msra.mxu0 0.0
    %310 = vmatprep.subr.mxu0 0.0
    %311 = vmatpush1.msra.mxu0 0.0
    %312 = vmatprep.subr.mxu0 0.0
    %313 = vmatpush1.msra.mxu0 0.0
    %314 = vmatprep.mubr.f32.mxu0 0.0
    %315 = vmatmul.mubr.f32.gmra.mrb[0].mxu0 %v245
    %v316 = vpop.f32.mrb[0].mxu0
    %v317 = vadd.f32 %v239, %v316
    %v318 = vpop.f32.mrb[0].mxu0
    %319 = vmatprep.mubr.f32.mxu0 0.0
    %320 = vmatmul.mubr.f32.gmra.mrb[0].mxu0 %v248
    %v321 = vpop.f32.mrb[0].mxu0
    %v322 = vadd.f32 %v241, %v321
    %v323 = vpop.f32.mrb[0].mxu0
    %324 = vdwg.mxu0
    %325 = vst.msk [vmem:[#allocation8] sm:$0xff] %vm74, %v317
    %326 = vst.msk [vmem:[#allocation8 + $0x8] sm:$0xff] %vm74, %v322
    %s327 = scalar_lea.vmem [#allocation2], 16
    %v328 = vld [vmem:[%s327] sm:$0xff]
    %v329 = vld [vmem:[%s327 + $0x8] sm:$0xff]
    %v330 = vand.u32 2147483647, %v328
    %v331 = vand.u32 2147483647, %v329
    %v332 = vsel %vm180, %v330, 0.0
    %v333 = vsel %vm180, %v331, 0.0
    %v334 = vadd.f32 %v332, %v333
    %v335 = vrot.slane %v334, 4
    %v336 = vadd.f32 %v334, %v335
    %v337 = vrot.slane %v336, 2
    %v338 = vadd.f32 %v336, %v337
    %v339 = vrot.slane %v338, 1
    %v340 = vadd.f32 %v338, %v339
    %v341 = vmax.f32 %v340, 1e-12
    %v342 = vrcp.pop %v341
    %343 = vxpose.xlu0.b32.start [1/16] %v342, 128
    %344 = vxpose.xlu0.b32.cont [2/16] 0.0, 128
    %345 = vxpose.xlu0.b32.cont [3/16] 0.0, 128
    %346 = vxpose.xlu0.b32.cont [4/16] 0.0, 128
    %347 = vxpose.xlu0.b32.cont [5/16] 0.0, 128
    %348 = vxpose.xlu0.b32.cont [6/16] 0.0, 128
    %349 = vxpose.xlu0.b32.cont [7/16] 0.0, 128
    %350 = vxpose.xlu0.b32.cont [8/16] 0.0, 128
    %351 = vxpose.xlu0.b32.cont [9/16] 0.0, 128
    %352 = vxpose.xlu0.b32.cont [10/16] 0.0, 128
    %353 = vxpose.xlu0.b32.cont [11/16] 0.0, 128
    %354 = vxpose.xlu0.b32.cont [12/16] 0.0, 128
    %355 = vxpose.xlu0.b32.cont [13/16] 0.0, 128
    %356 = vxpose.xlu0.b32.cont [14/16] 0.0, 128
    %357 = vxpose.xlu0.b32.cont [15/16] 0.0, 128
    %358 = vxpose.xlu0.b32.end [16/16] 0.0, 128
    %v359 = vpop.trf.xlu0
    %v360 = vpop.trf.xlu0
    %v361 = vpop.trf.xlu0
    %v362 = vpop.trf.xlu0
    %v363 = vpop.trf.xlu0
    %v364 = vpop.trf.xlu0
    %v365 = vpop.trf.xlu0
    %v366 = vpop.trf.xlu0
    %v367 = vpop.trf.xlu0
    %v368 = vpop.trf.xlu0
    %v369 = vpop.trf.xlu0
    %v370 = vpop.trf.xlu0
    %v371 = vpop.trf.xlu0
    %v372 = vpop.trf.xlu0
    %v373 = vpop.trf.xlu0
    %v374 = vpop.trf.xlu0
    %376 = vset.pattern.permute.xlu0 0
    %377 = vperm.xlu0 %376, %v359
    %v378 = vpop.permute.xlu0 %377
    %381 = vset.pattern.permute.xlu0 0
    %382 = vperm.xlu0 %381, %v360
    %v383 = vpop.permute.xlu0 %382
    %v385 = vmul.f32 %v174, %v378
    %v386 = vmul.f32 %v175, %v383
    %389 = vrot.lane.b32.xlu0 %v174, 96
    %v390 = vpop.permute.xlu0 %389
    %391 = vrot.lane.b32.xlu0 %v175, 96
    %v392 = vpop.permute.xlu0 %391
    %v396 = vsel %vm180, %v328, 0
    %v399 = vsel %vm180, %v329, 0
    %401 = vmatprep.subr.mxu0 0.0
    %402 = vmatpush1.msra.mxu0 %v385
    %403 = vmatprep.subr.mxu0 0.0
    %404 = vmatpush1.msra.mxu0 %v386
    %405 = vmatprep.subr.mxu0 0.0
    %406 = vmatpush1.msra.mxu0 0.0
    %407 = vmatprep.subr.mxu0 0.0
    %408 = vmatpush1.msra.mxu0 0.0
    %409 = vmatprep.subr.mxu0 0.0
    %410 = vmatpush1.msra.mxu0 0.0
    %411 = vmatprep.subr.mxu0 0.0
    %412 = vmatpush1.msra.mxu0 0.0
    %413 = vmatprep.subr.mxu0 0.0
    %414 = vmatpush1.msra.mxu0 0.0
    %415 = vmatprep.subr.mxu0 0.0
    %416 = vmatpush1.msra.mxu0 0.0
    %417 = vmatprep.subr.mxu0 0.0
    %418 = vmatpush1.msra.mxu0 0.0
    %419 = vmatprep.subr.mxu0 0.0
    %420 = vmatpush1.msra.mxu0 0.0
    %421 = vmatprep.subr.mxu0 0.0
    %422 = vmatpush1.msra.mxu0 0.0
    %423 = vmatprep.subr.mxu0 0.0
    %424 = vmatpush1.msra.mxu0 0.0
    %425 = vmatprep.subr.mxu0 0.0
    %426 = vmatpush1.msra.mxu0 0.0
    %427 = vmatprep.subr.mxu0 0.0
    %428 = vmatpush1.msra.mxu0 0.0
    %429 = vmatprep.subr.mxu0 0.0
    %430 = vmatpush1.msra.mxu0 0.0
    %431 = vmatprep.subr.mxu0 0.0
    %432 = vmatpush1.msra.mxu0 0.0
    %433 = vmatprep.subr.mxu0 0.0
    %434 = vmatpush1.msra.mxu0 0.0
    %435 = vmatprep.subr.mxu0 0.0
    %436 = vmatpush1.msra.mxu0 0.0
    %437 = vmatprep.subr.mxu0 0.0
    %438 = vmatpush1.msra.mxu0 0.0
    %439 = vmatprep.subr.mxu0 0.0
    %440 = vmatpush1.msra.mxu0 0.0
    %441 = vmatprep.subr.mxu0 0.0
    %442 = vmatpush1.msra.mxu0 0.0
    %443 = vmatprep.subr.mxu0 0.0
    %444 = vmatpush1.msra.mxu0 0.0
    %445 = vmatprep.subr.mxu0 0.0
    %446 = vmatpush1.msra.mxu0 0.0
    %447 = vmatprep.subr.mxu0 0.0
    %448 = vmatpush1.msra.mxu0 0.0
    %449 = vmatprep.subr.mxu0 0.0
    %450 = vmatpush1.msra.mxu0 0.0
    %451 = vmatprep.subr.mxu0 0.0
    %452 = vmatpush1.msra.mxu0 0.0
    %453 = vmatprep.subr.mxu0 0.0
    %454 = vmatpush1.msra.mxu0 0.0
    %455 = vmatprep.subr.mxu0 0.0
    %456 = vmatpush1.msra.mxu0 0.0
    %457 = vmatprep.subr.mxu0 0.0
    %458 = vmatpush1.msra.mxu0 0.0
    %459 = vmatprep.subr.mxu0 0.0
    %460 = vmatpush1.msra.mxu0 0.0
    %461 = vmatprep.subr.mxu0 0.0
    %462 = vmatpush1.msra.mxu0 0.0
    %463 = vmatprep.subr.mxu0 0.0
    %464 = vmatpush1.msra.mxu0 0.0
    %465 = vmatprep.mubr.f32.mxu0 0.0
    %466 = vmatmul.mubr.f32.gmra.mrb[0].mxu0 %v396
    %v467 = vpop.f32.mrb[0].mxu0
    %v468 = vadd.f32 %v390, %v467
    %v469 = vpop.f32.mrb[0].mxu0
    %470 = vmatprep.mubr.f32.mxu0 0.0
    %471 = vmatmul.mubr.f32.gmra.mrb[0].mxu0 %v399
    %v472 = vpop.f32.mrb[0].mxu0
    %v473 = vadd.f32 %v392, %v472
    %v474 = vpop.f32.mrb[0].mxu0
    %475 = vdwg.mxu0
    %476 = vst.msk [vmem:[#allocation8 + $0x10] sm:$0xff] %vm74, %v468
    %477 = vst.msk [vmem:[#allocation8 + $0x18] sm:$0xff] %vm74, %v473
    // Predicated region
    $region30: #{tpu_custom_call.1} parent=1 // pred_check
      _
    $region31: #{tpu_custom_call.1} parent=1 // pred_check_branch
      %479 = sbr.rel (0) target = $region33
    $region32: #{tpu_custom_call.1} parent=1 // pred_region
      %s481 = ssub.s32 512, 512
      %482 = vsyncadd [#allocation4], %s481
      %s483 = sshll.u32 [#allocation8], 4
      %s484 = int_to_ptr.vmem [resolvable:$true] %s483
      %489 = dma.vmem_to_hbm [thread:$0]  %s484, 512, %s4, [#allocation4], 128, 128, 8
    $region33: #{tpu_custom_call.1} parent=1 // pred_fallthru
      _
    // Predicated region
    $region34: #{tpu_custom_call.1} parent=1 // pred_check
      _
    $region35: #{tpu_custom_call.1} parent=1 // pred_check_branch
      %491 = sbr.rel (0) target = $region37
    $region36: #{tpu_custom_call.1} parent=1 // pred_region
      %492 = dma.done [#allocation4], 512
    $region37: #{tpu_custom_call.1} parent=1 // pred_fallthru
      _
    %493 = vsyncpa [#allocation3], 1
    %494 = vsyncpa [#allocation6], 1
    %495 = vsyncpa [#allocation4], 1

</llo_original>
